<compile_context>
chip_gen: v7x
topology: tpu7x:2x2x1
jax: 0.10.0
libtpu: 0.0.40
codegen_flags: <defaults>
</compile_context>

<pallas_src>
import functools
import math

import jax
import jax.numpy as jnp
from jax.experimental import pallas as pl
from jax.experimental.pallas import tpu as pltpu


L1_COEFF = 0.5
WEIGHT_NORMALIZE_EPS = 1e-8


def _round_up(x, m):
    return ((x + m - 1) // m) * m


def _vmem_capacity_bytes():
    try:
        return int(pltpu.get_tpu_info().vmem_capacity_bytes)
    except Exception:
        return 64 * 1024 * 1024  # conservative default (v7x per-TC VMEM)


def _pick_batch_tile(n_in, n_hid, vmem_cap, tb_max):
    """Largest batch tile whose double-buffered working set fits in ~half VMEM."""
    budget = int(vmem_cap * 0.5)  # headroom for compiler scratch / regalloc
    # double-buffered resident weights + biases + inv-norm (f32 in VMEM)
    resident = 2 * 4 * (2 * n_in * n_hid + 2 * n_hid + 2 * n_in)
    tb = max(8, (tb_max // 8) * 8)
    while tb > 8:
        # double-buffered per-tile blocks: h, acts, recon, l1, l2 (lane-padded)
        per_tile = 2 * 4 * tb * (2 * n_in + n_hid + 2 * 128)
        if resident + per_tile <= budget:
            break
        tb //= 2
    return max(tb, 8)


def _sae_fwd_kernel(h_ref, w_enc_ref, w_dec_ref, b_enc_ref, b_dec_ref, inv_ref,
                    acts_ref, recon_ref, l1_ref, l2_ref, *, compute_dtype):
    h = h_ref[0]            # [TB, n_in]
    w_enc = w_enc_ref[0]    # [n_in, n_hid]   (VMEM-resident across batch tiles)
    w_dec = w_dec_ref[0]    # [n_hid, n_in]   (VMEM-resident across batch tiles)
    b_enc = b_enc_ref[0]    # [1, n_hid]
    b_dec = b_dec_ref[0]    # [1, n_in]
    inv = inv_ref[0]        # [1, n_hid]      precomputed 1/(||W_dec_row|| + eps)

    # Encoder: (h - b_dec) @ W_enc + b_enc, ReLU   (MXU, f32 accumulation)
    h_cent = h - b_dec
    pre = jnp.dot(h_cent.astype(compute_dtype), w_enc.astype(compute_dtype),
                  preferred_element_type=jnp.float32) + b_enc
    acts = jnp.maximum(pre, 0.0)
    acts_ref[0] = acts.astype(acts_ref.dtype)

    # Decoder with normalization folded into acts:
    #   acts @ (diag(inv) @ W_dec) == (acts * inv) @ W_dec
    acts_scaled = acts * inv
    recon = jnp.dot(acts_scaled.astype(compute_dtype), w_dec.astype(compute_dtype),
                    preferred_element_type=jnp.float32) + b_dec
    recon_ref[0] = recon.astype(recon_ref.dtype)

    # Per-row losses reduced over the feature axis (independent per row, so
    # padded batch rows need no masking — the wrapper slices them off).
    diff = recon - h
    l2_ref[0] = jnp.mean(diff * diff, axis=-1, keepdims=True)   # [TB, 1]
    l1_ref[0] = jnp.sum(jnp.abs(acts), axis=-1, keepdims=True)  # [TB, 1]


def sae_forward_instance_major(h_im, w_enc, w_dec, b_enc, b_dec, *,
                               l1_coeff=L1_COEFF, eps=WEIGHT_NORMALIZE_EPS,
                               compute_dtype=jnp.float32, tb_max=1024):
    """Core (transpose-free) entry point.

    h_im: [n_instances, batch, n_input_ae] float32.
    Returns (l1 [I,B], l2 [I,B], loss scalar, acts [I,B,n_hid], recon [I,B,n_in]).
    """
    n_inst, batch, n_in = h_im.shape
    n_hid = w_enc.shape[-1]
    out_dtype = h_im.dtype

    # Decoder inverse column-norm, computed once in the wrapper (tiny: one
    # read of W_dec) instead of re-normalizing W_dec every grid step.
    inv_norm = (1.0 / (jnp.linalg.norm(w_dec.astype(jnp.float32), axis=-1) + eps)
                ).reshape(n_inst, 1, n_hid)
    b_enc_im = b_enc.reshape(n_inst, 1, n_hid).astype(jnp.float32)
    b_dec_im = b_dec.reshape(n_inst, 1, n_in).astype(jnp.float32)

    # Batch-tile selection bounded by VMEM capacity of this generation.
    vmem_cap = _vmem_capacity_bytes()
    tb = _pick_batch_tile(n_in, n_hid, vmem_cap, tb_max)
    tb = min(tb, _round_up(batch, 8))            # multiple of 8 by construction
    padded_batch = _round_up(batch, tb)
    if padded_batch != batch:
        h_im = jnp.pad(h_im, ((0, 0), (0, padded_batch - batch), (0, 0)))
    n_btiles = padded_batch // tb

    # Explicit VMEM limit (resident weights + double-buffered tiles + slack).
    resident = 2 * 4 * (2 * n_in * n_hid + 2 * n_hid + 2 * n_in)
    per_tile = 2 * 4 * tb * (2 * n_in + n_hid + 2 * 128)
    vmem_limit = int(min(vmem_cap * 0.9,
                         max(32 * 1024 * 1024, 2 * (resident + per_tile))))

    flops = 4 * n_inst * padded_batch * n_in * n_hid   # two matmuls, 2 flops/MAC
    bytes_in = 4 * (n_inst * padded_batch * n_in
                    + 2 * n_inst * n_in * n_hid + 3 * n_inst * n_hid
                    + 2 * n_inst * n_in)
    bytes_out = 4 * n_inst * padded_batch * (n_hid + n_in + 2)
    cost = pl.CostEstimate(flops=flops, transcendentals=0,
                           bytes_accessed=bytes_in + bytes_out)

    kernel = functools.partial(_sae_fwd_kernel, compute_dtype=compute_dtype)

    acts_im, recon_im, l1_im, l2_im = pl.pallas_call(
        kernel,
        grid=(n_inst, n_btiles),
        in_specs=[
            pl.BlockSpec((1, tb, n_in), lambda i, b: (i, b, 0)),     # h tile
            pl.BlockSpec((1, n_in, n_hid), lambda i, b: (i, 0, 0)),  # W_enc (resident)
            pl.BlockSpec((1, n_hid, n_in), lambda i, b: (i, 0, 0)),  # W_dec (resident)
            pl.BlockSpec((1, 1, n_hid), lambda i, b: (i, 0, 0)),     # b_enc
            pl.BlockSpec((1, 1, n_in), lambda i, b: (i, 0, 0)),      # b_dec
            pl.BlockSpec((1, 1, n_hid), lambda i, b: (i, 0, 0)),     # inv_norm
        ],
        out_specs=(
            pl.BlockSpec((1, tb, n_hid), lambda i, b: (i, b, 0)),    # acts
            pl.BlockSpec((1, tb, n_in), lambda i, b: (i, b, 0)),     # recon
            pl.BlockSpec((1, tb, 1), lambda i, b: (i, b, 0)),        # l1
            pl.BlockSpec((1, tb, 1), lambda i, b: (i, b, 0)),        # l2
        ),
        out_shape=(
            jax.ShapeDtypeStruct((n_inst, padded_batch, n_hid), out_dtype),
            jax.ShapeDtypeStruct((n_inst, padded_batch, n_in), out_dtype),
            jax.ShapeDtypeStruct((n_inst, padded_batch, 1), jnp.float32),
            jax.ShapeDtypeStruct((n_inst, padded_batch, 1), jnp.float32),
        ),
        compiler_params=pltpu.CompilerParams(
            dimension_semantics=("parallel", "parallel"),
            vmem_limit_bytes=vmem_limit),
        cost_estimate=cost,
    )(h_im, w_enc, w_dec, b_enc_im, b_dec_im, inv_norm)

    # Drop padded rows, then the scalar loss (cheap glue).
    acts_im = acts_im[:, :batch]
    recon_im = recon_im[:, :batch]
    l1 = l1_im[:, :batch, 0]   # [I, B]
    l2 = l2_im[:, :batch, 0]   # [I, B]
    loss = jnp.sum(jnp.mean(l1_coeff * l1 + l2, axis=1))
    return l1, l2, loss, acts_im, recon_im


def autoencoder_forward(h, w_enc, w_dec, b_enc, b_dec, **kwargs):
    """PyTorch-layout wrapper: h is [batch, n_instances, n_input_ae].

    Returns (l1_loss, l2_loss, loss, acts, h_reconstructed) with the same
    shapes/semantics as AutoEncoder.forward.  The transposes here are API
    compatibility glue; prefer sae_forward_instance_major when the caller can
    keep activations instance-major.
    """
    h_im = jnp.transpose(h, (1, 0, 2))
    l1_im, l2_im, loss, acts_im, recon_im = sae_forward_instance_major(
        h_im, w_enc, w_dec, b_enc, b_dec, **kwargs)
    return (jnp.transpose(l1_im, (1, 0)),
            jnp.transpose(l2_im, (1, 0)),
            loss,
            jnp.transpose(acts_im, (1, 0, 2)),
            jnp.transpose(recon_im, (1, 0, 2)))


def _xavier_normal(key, shape):
    # Matches torch.nn.init.xavier_normal_ fan computation for 3D tensors.
    receptive = 1
    for d in shape[2:]:
        receptive *= d
    fan_in = shape[1] * receptive
    fan_out = shape[0] * receptive
    std = math.sqrt(2.0 / (fan_in + fan_out))
    return std * jax.random.normal(key, shape, dtype=jnp.float32)


def _reference_forward(h, w_enc, w_dec, b_enc, b_dec):
    h_cent = h - b_dec[None, :, :]
    acts = jnp.einsum("bif,ifh->bih", h_cent, w_enc) + b_enc[None, :, :]
    acts = jnp.maximum(acts, 0.0)
    norm = jnp.linalg.norm(w_dec, axis=2, keepdims=True)
    w_dec_n = w_dec / (norm + WEIGHT_NORMALIZE_EPS)
    recon = jnp.einsum("bih,ihf->bif", acts, w_dec_n) + b_dec[None, :, :]
    l2 = jnp.mean((recon - h) ** 2, axis=-1)
    l1 = jnp.sum(jnp.abs(acts), axis=-1)
    loss = jnp.sum(jnp.mean(L1_COEFF * l1 + l2, axis=0))
    return l1, l2, loss, acts, recon


if __name__ == "__main__":
    # Small shapes consistent with the module (n_hidden_ae = 2 * n_input_ae).
    batch = 12            # (batch_size * seq) rows fed to the SAE; ragged vs tile
    n_instances = 2
    n_input_ae = 64
    n_hidden_ae = 2 * n_input_ae

    key = jax.random.PRNGKey(0)
    k_h, k_we, k_wd = jax.random.split(key, 3)

    h = jax.random.normal(k_h, (batch, n_instances, n_input_ae), dtype=jnp.float32)
    W_enc = _xavier_normal(k_we, (n_instances, n_input_ae, n_hidden_ae))
    W_dec = _xavier_normal(k_wd, (n_instances, n_hidden_ae, n_input_ae))
    b_enc = jnp.zeros((n_instances, n_hidden_ae), dtype=jnp.float32)
    b_dec = jnp.zeros((n_instances, n_input_ae), dtype=jnp.float32)

    # f32 path, tb_max=8 forces multiple batch tiles + padding (12 -> 16).
    out = autoencoder_forward(h, W_enc, W_dec, b_enc, b_dec, tb_max=8)
    out = jax.block_until_ready(out)

    ref = _reference_forward(h, W_enc, W_dec, b_enc, b_dec)
    for got, want in zip(out, ref):
        assert got.shape == want.shape
        assert jnp.allclose(got, want, atol=2e-4, rtol=2e-4)

    # bf16-operand path (v6e/v7x MXU / bandwidth optimization), loose check.
    out_bf16 = autoencoder_forward(h, W_enc, W_dec, b_enc, b_dec,
                                   compute_dtype=jnp.bfloat16, tb_max=8)
    out_bf16 = jax.block_until_ready(out_bf16)
    loss_bf16 = float(out_bf16[2])
    loss_ref = float(ref[2])
    assert math.isfinite(loss_bf16)
    assert abs(loss_bf16 - loss_ref) <= 0.05 * abs(loss_ref) + 1e-3

    print("KERNEL_OK")
</pallas_src>

<mosaic_0001>
module attributes {stable_mosaic.version = 11 : i64} {
  func.func @_sae_fwd_kernel(%arg0: i32, %arg1: i32, %arg2: memref<1x8x64xf32, #tpu.memory_space<vmem>>, %arg3: memref<1x64x128xf32, #tpu.memory_space<vmem>>, %arg4: memref<1x128x64xf32, #tpu.memory_space<vmem>>, %arg5: memref<1x1x128xf32, #tpu.memory_space<vmem>>, %arg6: memref<1x1x64xf32, #tpu.memory_space<vmem>>, %arg7: memref<1x1x128xf32, #tpu.memory_space<vmem>>, %arg8: memref<1x8x128xf32, #tpu.memory_space<vmem>>, %arg9: memref<1x8x64xf32, #tpu.memory_space<vmem>>, %arg10: memref<1x8x1xf32, #tpu.memory_space<vmem>>, %arg11: memref<1x8x1xf32, #tpu.memory_space<vmem>>) attributes {dimension_semantics = [#tpu.dimension_semantics<parallel>, #tpu.dimension_semantics<parallel>], iteration_bounds = array<i64: 2, 2>, scalar_prefetch = 0 : i64, scratch_operands = 0 : i64, tpu.core_type = #tpu.core_type<tc>, window_params = [{transform_indices = @transform_0, window_bounds = array<i64: 1, 8, 64>}, {transform_indices = @transform_1, window_bounds = array<i64: 1, 64, 128>}, {transform_indices = @transform_2, window_bounds = array<i64: 1, 128, 64>}, {transform_indices = @transform_3, window_bounds = array<i64: 1, 1, 128>}, {transform_indices = @transform_4, window_bounds = array<i64: 1, 1, 64>}, {transform_indices = @transform_5, window_bounds = array<i64: 1, 1, 128>}, {transform_indices = @transform_6, window_bounds = array<i64: 1, 8, 128>}, {transform_indices = @transform_7, window_bounds = array<i64: 1, 8, 64>}, {transform_indices = @transform_8, window_bounds = array<i64: 1, 8, 1>}, {transform_indices = @transform_9, window_bounds = array<i64: 1, 8, 1>}]} {
    %c0 = arith.constant 0 : index
    %c0_0 = arith.constant 0 : index
    %c0_1 = arith.constant 0 : index
    %0 = vector.load %arg2[%c0, %c0_0, %c0_1] : memref<1x8x64xf32, #tpu.memory_space<vmem>>, vector<1x8x64xf32>
    %1 = vector.shape_cast %0 : vector<1x8x64xf32> to vector<8x64xf32>
    %c0_2 = arith.constant 0 : index
    %c0_3 = arith.constant 0 : index
    %c0_4 = arith.constant 0 : index
    %2 = vector.load %arg3[%c0_2, %c0_3, %c0_4] : memref<1x64x128xf32, #tpu.memory_space<vmem>>, vector<1x64x128xf32>
    %3 = vector.shape_cast %2 : vector<1x64x128xf32> to vector<64x128xf32>
    %c0_5 = arith.constant 0 : index
    %c0_6 = arith.constant 0 : index
    %c0_7 = arith.constant 0 : index
    %4 = vector.load %arg4[%c0_5, %c0_6, %c0_7] : memref<1x128x64xf32, #tpu.memory_space<vmem>>, vector<1x128x64xf32>
    %5 = vector.shape_cast %4 : vector<1x128x64xf32> to vector<128x64xf32>
    %c0_8 = arith.constant 0 : index
    %c0_9 = arith.constant 0 : index
    %c0_10 = arith.constant 0 : index
    %6 = vector.load %arg5[%c0_8, %c0_9, %c0_10] : memref<1x1x128xf32, #tpu.memory_space<vmem>>, vector<1x1x128xf32>
    %7 = vector.shape_cast %6 : vector<1x1x128xf32> to vector<1x128xf32>
    %c0_11 = arith.constant 0 : index
    %c0_12 = arith.constant 0 : index
    %c0_13 = arith.constant 0 : index
    %8 = vector.load %arg6[%c0_11, %c0_12, %c0_13] : memref<1x1x64xf32, #tpu.memory_space<vmem>>, vector<1x1x64xf32>
    %9 = vector.shape_cast %8 : vector<1x1x64xf32> to vector<1x64xf32>
    %c0_14 = arith.constant 0 : index
    %c0_15 = arith.constant 0 : index
    %c0_16 = arith.constant 0 : index
    %10 = vector.load %arg7[%c0_14, %c0_15, %c0_16] : memref<1x1x128xf32, #tpu.memory_space<vmem>>, vector<1x1x128xf32>
    %11 = vector.shape_cast %10 : vector<1x1x128xf32> to vector<1x128xf32>
    %12 = vector.broadcast %9 : vector<1x64xf32> to vector<8x64xf32>
    %13 = arith.subf %1, %12 : vector<8x64xf32>
    %cst = arith.constant dense<0.000000e+00> : vector<8x128xf32>
    %14 = tpu.matmul %13, %3, %cst {dimension_numbers = #tpu.dot_dimension_numbers<[1], [0], [0], [1], [0, 0, 1, 1], [], []>} : vector<8x64xf32>, vector<64x128xf32>, vector<8x128xf32> -> vector<8x128xf32>
    %15 = vector.broadcast %7 : vector<1x128xf32> to vector<8x128xf32>
    %16 = arith.addf %14, %15 : vector<8x128xf32>
    %cst_17 = arith.constant 0.000000e+00 : f32
    %17 = vector.broadcast %cst_17 : f32 to vector<8x128xf32>
    %18 = arith.maximumf %16, %17 : vector<8x128xf32>
    %c0_18 = arith.constant 0 : index
    %c0_19 = arith.constant 0 : index
    %c0_20 = arith.constant 0 : index
    %19 = vector.load %arg8[%c0_18, %c0_19, %c0_20] : memref<1x8x128xf32, #tpu.memory_space<vmem>>, vector<1x8x128xf32>
    %20 = vector.shape_cast %19 : vector<1x8x128xf32> to vector<8x128xf32>
    %21 = vector.shape_cast %18 : vector<8x128xf32> to vector<1x8x128xf32>
    tpu.vector_store %arg8[%c0_18, %c0_19, %c0_20], %21 {strides = array<i32>} : memref<1x8x128xf32, #tpu.memory_space<vmem>>, vector<1x8x128xf32>,
    %22 = vector.broadcast %11 : vector<1x128xf32> to vector<8x128xf32>
    %23 = arith.mulf %18, %22 : vector<8x128xf32>
    %cst_21 = arith.constant dense<0.000000e+00> : vector<8x64xf32>
    %24 = tpu.matmul %23, %5, %cst_21 {dimension_numbers = #tpu.dot_dimension_numbers<[1], [0], [0], [1], [0, 0, 1, 1], [], []>} : vector<8x128xf32>, vector<128x64xf32>, vector<8x64xf32> -> vector<8x64xf32>
    %25 = vector.broadcast %9 : vector<1x64xf32> to vector<8x64xf32>
    %26 = arith.addf %24, %25 : vector<8x64xf32>
    %c0_22 = arith.constant 0 : index
    %c0_23 = arith.constant 0 : index
    %c0_24 = arith.constant 0 : index
    %27 = vector.load %arg9[%c0_22, %c0_23, %c0_24] : memref<1x8x64xf32, #tpu.memory_space<vmem>>, vector<1x8x64xf32>
    %28 = vector.shape_cast %27 : vector<1x8x64xf32> to vector<8x64xf32>
    %29 = vector.shape_cast %26 : vector<8x64xf32> to vector<1x8x64xf32>
    tpu.vector_store %arg9[%c0_22, %c0_23, %c0_24], %29 {strides = array<i32>} : memref<1x8x64xf32, #tpu.memory_space<vmem>>, vector<1x8x64xf32>,
    %30 = arith.subf %26, %1 : vector<8x64xf32>
    %31 = arith.mulf %30, %30 : vector<8x64xf32>
    %cst_25 = arith.constant dense<0.000000e+00> : vector<8xf32>
    %32 = vector.multi_reduction <add>, %31, %cst_25 [1] : vector<8x64xf32> to vector<8xf32>
    %33 = vector.shape_cast %32 : vector<8xf32> to vector<8x1xf32>
    %cst_26 = arith.constant 6.400000e+01 : f32
    %34 = vector.broadcast %cst_26 : f32 to vector<8x1xf32>
    %35 = arith.divf %33, %34 : vector<8x1xf32>
    %c0_27 = arith.constant 0 : index
    %c0_28 = arith.constant 0 : index
    %c0_29 = arith.constant 0 : index
    %36 = vector.load %arg11[%c0_27, %c0_28, %c0_29] : memref<1x8x1xf32, #tpu.memory_space<vmem>>, vector<1x8x1xf32>
    %37 = vector.shape_cast %36 : vector<1x8x1xf32> to vector<8x1xf32>
    %38 = vector.shape_cast %35 : vector<8x1xf32> to vector<1x8x1xf32>
    tpu.vector_store %arg11[%c0_27, %c0_28, %c0_29], %38 {strides = array<i32>} : memref<1x8x1xf32, #tpu.memory_space<vmem>>, vector<1x8x1xf32>,
    %39 = math.absf %18 : vector<8x128xf32>
    %cst_30 = arith.constant dense<0.000000e+00> : vector<8xf32>
    %40 = vector.multi_reduction <add>, %39, %cst_30 [1] : vector<8x128xf32> to vector<8xf32>
    %41 = vector.shape_cast %40 : vector<8xf32> to vector<8x1xf32>
    %c0_31 = arith.constant 0 : index
    %c0_32 = arith.constant 0 : index
    %c0_33 = arith.constant 0 : index
    %42 = vector.load %arg10[%c0_31, %c0_32, %c0_33] : memref<1x8x1xf32, #tpu.memory_space<vmem>>, vector<1x8x1xf32>
    %43 = vector.shape_cast %42 : vector<1x8x1xf32> to vector<8x1xf32>
    %44 = vector.shape_cast %41 : vector<8x1xf32> to vector<1x8x1xf32>
    tpu.vector_store %arg10[%c0_31, %c0_32, %c0_33], %44 {strides = array<i32>} : memref<1x8x1xf32, #tpu.memory_space<vmem>>, vector<1x8x1xf32>,
    return
  }
  func.func @transform_0(%arg0: i32, %arg1: i32) -> (i32, i32, i32) {
    %c0_i32 = arith.constant 0 : i32
    %c0_i32_0 = arith.constant 0 : i32
    return %arg0, %arg1, %c0_i32 : i32, i32, i32
  }
  func.func @transform_1(%arg0: i32, %arg1: i32) -> (i32, i32, i32) {
    %c0_i32 = arith.constant 0 : i32
    %c0_i32_0 = arith.constant 0 : i32
    %c0_i32_1 = arith.constant 0 : i32
    return %arg0, %c0_i32, %c0_i32_0 : i32, i32, i32
  }
  func.func @transform_2(%arg0: i32, %arg1: i32) -> (i32, i32, i32) {
    %c0_i32 = arith.constant 0 : i32
    %c0_i32_0 = arith.constant 0 : i32
    %c0_i32_1 = arith.constant 0 : i32
    return %arg0, %c0_i32, %c0_i32_0 : i32, i32, i32
  }
  func.func @transform_3(%arg0: i32, %arg1: i32) -> (i32, i32, i32) {
    %c0_i32 = arith.constant 0 : i32
    %c0_i32_0 = arith.constant 0 : i32
    %c0_i32_1 = arith.constant 0 : i32
    return %arg0, %c0_i32, %c0_i32_0 : i32, i32, i32
  }
  func.func @transform_4(%arg0: i32, %arg1: i32) -> (i32, i32, i32) {
    %c0_i32 = arith.constant 0 : i32
    %c0_i32_0 = arith.constant 0 : i32
    %c0_i32_1 = arith.constant 0 : i32
    return %arg0, %c0_i32, %c0_i32_0 : i32, i32, i32
  }
  func.func @transform_5(%arg0: i32, %arg1: i32) -> (i32, i32, i32) {
    %c0_i32 = arith.constant 0 : i32
    %c0_i32_0 = arith.constant 0 : i32
    %c0_i32_1 = arith.constant 0 : i32
    return %arg0, %c0_i32, %c0_i32_0 : i32, i32, i32
  }
  func.func @transform_6(%arg0: i32, %arg1: i32) -> (i32, i32, i32) {
    %c0_i32 = arith.constant 0 : i32
    %c0_i32_0 = arith.constant 0 : i32
    return %arg0, %arg1, %c0_i32 : i32, i32, i32
  }
  func.func @transform_7(%arg0: i32, %arg1: i32) -> (i32, i32, i32) {
    %c0_i32 = arith.constant 0 : i32
    %c0_i32_0 = arith.constant 0 : i32
    return %arg0, %arg1, %c0_i32 : i32, i32, i32
  }
  func.func @transform_8(%arg0: i32, %arg1: i32) -> (i32, i32, i32) {
    %c0_i32 = arith.constant 0 : i32
    %c0_i32_0 = arith.constant 0 : i32
    return %arg0, %arg1, %c0_i32 : i32, i32, i32
  }
  func.func @transform_9(%arg0: i32, %arg1: i32) -> (i32, i32, i32) {
    %c0_i32 = arith.constant 0 : i32
    %c0_i32_0 = arith.constant 0 : i32
    return %arg0, %arg1, %c0_i32 : i32, i32, i32
  }
}

</mosaic_0001>

<llo_original>
// kernel: tpu_custom_call.1
$region0: #{tpu_custom_call.1}
  #allocation0 [shape = 'u32[]', space=smem, size = 0x4, offset = 0x4, fixed_abs, tag = 'smem constant byte address 0x4 - core index']
  #allocation1 [shape = 'u32[144,128]{1,0:T(1,128)}', space=vmem, size = 0x12000, scoped, tag = 'internal scratch']
  %s0 = inlined_call_operand.vmem [shape: f32[2,16,64], index: 0, kind: input, shape index: {}]
  %s1 = inlined_call_operand.vmem [shape: f32[2,64,128], index: 1, kind: input, shape index: {}]
  %s2 = inlined_call_operand.vmem [shape: f32[2,128,64], index: 2, kind: input, shape index: {}]
  %s3 = inlined_call_operand.vmem [shape: f32[2,1,128], index: 3, kind: input, shape index: {}]
  %s4 = inlined_call_operand.vmem [shape: f32[2,1,64], index: 4, kind: input, shape index: {}]
  %s5 = inlined_call_operand.vmem [shape: f32[2,1,128], index: 5, kind: input, shape index: {}]
  %s6 = inlined_call_operand.hbm [shape: f32[2,16,128], index: 6, kind: output, shape index: {0}]
  %s7 = inlined_call_operand.hbm [shape: f32[2,16,64], index: 7, kind: output, shape index: {1}]
  %s8 = inlined_call_operand.vmem [shape: f32[2,16,1], index: 8, kind: output, shape index: {2}]
  %s9 = inlined_call_operand.vmem [shape: f32[2,16,1], index: 9, kind: output, shape index: {3}]
  %10 = xla_tuple %s6, %s7, %s8, %s9
  %s11 = sld [smem:[#allocation0]]
  $region81: #{tpu_custom_call.1} parent=0
    _
  %s13 = ssub.s32 1, %s11
  %s14 = scalar_select 0, %s13, %s11
  $region1: #{tpu_custom_call.1} parent=0
    #allocation2 [shape = 'u8[8192]{0}', space=vmem, size = 0x2000, scoped, tag = 'output window, operand 0']
    #allocation3 [shape = 's32[2]{0}', space=sflag, size = 0x8, scoped, tag = 'scoped memory for tpu_custom_call.1']
    #allocation4 [shape = 'u8[8192]{0}', space=vmem, size = 0x2000, scoped, tag = 'output window, operand 1']
    #allocation5 [shape = 's32[2]{0}', space=sflag, size = 0x8, scoped, tag = 'scoped memory for tpu_custom_call.1']
    %15 = vsyncpa [#allocation3], 0
    %s16 = scalar_lea.sflag [#allocation3], 1
    %17 = vsyncpa %s16, 0
    %18 = vsyncpa [#allocation5], 0
    %s19 = scalar_lea.sflag [#allocation5], 1
    %20 = vsyncpa %s19, 0
    loop: start=0, step=1, limit=6
    $region2: #{tpu_custom_call.1} parent=1 // loop_pre_header
      _
    $region3: #{tpu_custom_call.1} parent=1 // loop_header
      %s22 = sphi 0, %s26
      %p23 = scmp.ge.s32.totalorder %s22, 6
      %s29 = sphi 0, %s41
      %s30 = sphi 0, %s37
      %s31 = sphi 0, %s29
      %s32 = sphi 0, %s30
      %s33 = sphi 0, %s31
      %s34 = sphi 0, %s32
      %s46 = sphi 0, %s48
      %s49 = sphi 0, %s46
      %s50 = sphi 0, %s49
      %s66 = sphi 0, %s50
      %s72 = sphi 0, %s74
      %s75 = sphi 0, %s72
      %s76 = sphi 0, %s75
      %s92 = sphi 0, %s76
      %s98 = sphi 0, %s100
      %s101 = sphi 0, %s98
      %s102 = sphi 0, %s101
      %s118 = sphi 0, %s102
      %s124 = sphi 0, %s126
      %s127 = sphi 0, %s124
      %s128 = sphi 0, %s127
      %s144 = sphi 0, %s128
      %s150 = sphi 0, %s152
      %s153 = sphi 0, %s150
      %s154 = sphi 0, %s153
      %s170 = sphi 0, %s154
      %s176 = sphi 0, %s178
      %s179 = sphi 0, %s176
      %s180 = sphi 0, %s179
      %s196 = sphi 0, %s180
      %s204 = sphi 0, %s206
      %s207 = sphi 0, %s204
      %s208 = sphi 0, %s207
      %s224 = sphi 0, %s208
      %s232 = sphi 0, %s234
      %s235 = sphi 0, %s232
      %s236 = sphi 0, %s235
      %s252 = sphi 0, %s236
      %s260 = sphi 0, %s262
      %s263 = sphi 0, %s260
      %s264 = sphi 0, %s263
      %s280 = sphi 0, %s264
      %s288 = sphi 0, %s290
      %s291 = sphi 0, %s288
      %s292 = sphi 0, %s291
      %s308 = sphi 0, %s292
    $region4: #{tpu_custom_call.1} parent=1 // loop_header_branch
      %25 = sbr.rel (%p23) target = $region8
    $region5: #{tpu_custom_call.1} parent=1 // loop_body
      %s27 = ssub.s32 %s22, 1
      %s28 = ssub.s32 %s22, 2
      %s35 = sadd.s32 1, %s30
      %p36 = scmp.ge.s32.totalorder %s35, 2
      %s37 = scalar_select %p36, 0, %s35
      %s38 = sadd.s32 1, %s29
      %s39 = scalar_select %p36, %s38, %s29
      %p40 = scmp.ge.s32.totalorder %s39, 2
      %s41 = scalar_select %p40, 0, %s39
      %s42 = ssub.s32 %s29, %s41
      %s43 = ssub.s32 %s30, %s37
      %s44 = sor.u32 %s42, %s43
      %p45 = scmp.eq.s32.totalorder %s44, 0
      %s47 = sadd.s32 %s46, 1
      %s48 = scalar_select %p45, %s46, %s47
      %p51 = pneg %p45
      %p52 = scmp.eq.s32.totalorder %s22, 3
      %p53 = por %p51, %p52
      %p54 = scmp.ne.s32.totalorder %s46, %s49
      %p55 = scmp.eq.s32.totalorder %s22, 0
      %p56 = por %p54, %p55
      %p57 = scmp.ne.s32.totalorder %s46, %s49
      %p58 = scmp.eq.s32.totalorder %s27, 3
      %p59 = por %p57, %p58
      %p60 = scmp.ne.s32.totalorder %s49, %s50
      %p61 = scmp.eq.s32.totalorder %s27, 0
      %p62 = por %p60, %p61
      %p63 = scmp.ne.s32.totalorder %s49, %s50
      %p64 = scmp.eq.s32.totalorder %s28, 3
      %p65 = por %p63, %p64
      %p67 = scmp.ne.s32.totalorder %s50, %s66
      %p68 = scmp.eq.s32.totalorder %s28, 0
      %p69 = por %p67, %p68
      %s70 = ssub.s32 %s29, %s41
      %p71 = scmp.eq.s32.totalorder %s70, 0
      %s73 = sadd.s32 %s72, 1
      %s74 = scalar_select %p71, %s72, %s73
      %p77 = pneg %p71
      %p78 = scmp.eq.s32.totalorder %s22, 3
      %p79 = por %p77, %p78
      %p80 = scmp.ne.s32.totalorder %s72, %s75
      %p81 = scmp.eq.s32.totalorder %s22, 0
      %p82 = por %p80, %p81
      %p83 = scmp.ne.s32.totalorder %s72, %s75
      %p84 = scmp.eq.s32.totalorder %s27, 3
      %p85 = por %p83, %p84
      %p86 = scmp.ne.s32.totalorder %s75, %s76
      %p87 = scmp.eq.s32.totalorder %s27, 0
      %p88 = por %p86, %p87
      %p89 = scmp.ne.s32.totalorder %s75, %s76
      %p90 = scmp.eq.s32.totalorder %s28, 3
      %p91 = por %p89, %p90
      %p93 = scmp.ne.s32.totalorder %s76, %s92
      %p94 = scmp.eq.s32.totalorder %s28, 0
      %p95 = por %p93, %p94
      %s96 = ssub.s32 %s29, %s41
      %p97 = scmp.eq.s32.totalorder %s96, 0
      %s99 = sadd.s32 %s98, 1
      %s100 = scalar_select %p97, %s98, %s99
      %p103 = pneg %p97
      %p104 = scmp.eq.s32.totalorder %s22, 3
      %p105 = por %p103, %p104
      %p106 = scmp.ne.s32.totalorder %s98, %s101
      %p107 = scmp.eq.s32.totalorder %s22, 0
      %p108 = por %p106, %p107
      %p109 = scmp.ne.s32.totalorder %s98, %s101
      %p110 = scmp.eq.s32.totalorder %s27, 3
      %p111 = por %p109, %p110
      %p112 = scmp.ne.s32.totalorder %s101, %s102
      %p113 = scmp.eq.s32.totalorder %s27, 0
      %p114 = por %p112, %p113
      %p115 = scmp.ne.s32.totalorder %s101, %s102
      %p116 = scmp.eq.s32.totalorder %s28, 3
      %p117 = por %p115, %p116
      %p119 = scmp.ne.s32.totalorder %s102, %s118
      %p120 = scmp.eq.s32.totalorder %s28, 0
      %p121 = por %p119, %p120
      %s122 = ssub.s32 %s29, %s41
      %p123 = scmp.eq.s32.totalorder %s122, 0
      %s125 = sadd.s32 %s124, 1
      %s126 = scalar_select %p123, %s124, %s125
      %p129 = pneg %p123
      %p130 = scmp.eq.s32.totalorder %s22, 3
      %p131 = por %p129, %p130
      %p132 = scmp.ne.s32.totalorder %s124, %s127
      %p133 = scmp.eq.s32.totalorder %s22, 0
      %p134 = por %p132, %p133
      %p135 = scmp.ne.s32.totalorder %s124, %s127
      %p136 = scmp.eq.s32.totalorder %s27, 3
      %p137 = por %p135, %p136
      %p138 = scmp.ne.s32.totalorder %s127, %s128
      %p139 = scmp.eq.s32.totalorder %s27, 0
      %p140 = por %p138, %p139
      %p141 = scmp.ne.s32.totalorder %s127, %s128
      %p142 = scmp.eq.s32.totalorder %s28, 3
      %p143 = por %p141, %p142
      %p145 = scmp.ne.s32.totalorder %s128, %s144
      %p146 = scmp.eq.s32.totalorder %s28, 0
      %p147 = por %p145, %p146
      %s148 = ssub.s32 %s29, %s41
      %p149 = scmp.eq.s32.totalorder %s148, 0
      %s151 = sadd.s32 %s150, 1
      %s152 = scalar_select %p149, %s150, %s151
      %p155 = pneg %p149
      %p156 = scmp.eq.s32.totalorder %s22, 3
      %p157 = por %p155, %p156
      %p158 = scmp.ne.s32.totalorder %s150, %s153
      %p159 = scmp.eq.s32.totalorder %s22, 0
      %p160 = por %p158, %p159
      %p161 = scmp.ne.s32.totalorder %s150, %s153
      %p162 = scmp.eq.s32.totalorder %s27, 3
      %p163 = por %p161, %p162
      %p164 = scmp.ne.s32.totalorder %s153, %s154
      %p165 = scmp.eq.s32.totalorder %s27, 0
      %p166 = por %p164, %p165
      %p167 = scmp.ne.s32.totalorder %s153, %s154
      %p168 = scmp.eq.s32.totalorder %s28, 3
      %p169 = por %p167, %p168
      %p171 = scmp.ne.s32.totalorder %s154, %s170
      %p172 = scmp.eq.s32.totalorder %s28, 0
      %p173 = por %p171, %p172
      %s174 = ssub.s32 %s29, %s41
      %p175 = scmp.eq.s32.totalorder %s174, 0
      %s177 = sadd.s32 %s176, 1
      %s178 = scalar_select %p175, %s176, %s177
      %p181 = pneg %p175
      %p182 = scmp.eq.s32.totalorder %s22, 3
      %p183 = por %p181, %p182
      %p184 = scmp.ne.s32.totalorder %s176, %s179
      %p185 = scmp.eq.s32.totalorder %s22, 0
      %p186 = por %p184, %p185
      %p187 = scmp.ne.s32.totalorder %s176, %s179
      %p188 = scmp.eq.s32.totalorder %s27, 3
      %p189 = por %p187, %p188
      %p190 = scmp.ne.s32.totalorder %s179, %s180
      %p191 = scmp.eq.s32.totalorder %s27, 0
      %p192 = por %p190, %p191
      %p193 = scmp.ne.s32.totalorder %s179, %s180
      %p194 = scmp.eq.s32.totalorder %s28, 3
      %p195 = por %p193, %p194
      %p197 = scmp.ne.s32.totalorder %s180, %s196
      %p198 = scmp.eq.s32.totalorder %s28, 0
      %p199 = por %p197, %p198
      %s200 = ssub.s32 %s29, %s41
      %s201 = ssub.s32 %s30, %s37
      %s202 = sor.u32 %s200, %s201
      %p203 = scmp.eq.s32.totalorder %s202, 0
      %s205 = sadd.s32 %s204, 1
      %s206 = scalar_select %p203, %s204, %s205
      %p209 = pneg %p203
      %p210 = scmp.eq.s32.totalorder %s22, 3
      %p211 = por %p209, %p210
      %p212 = scmp.ne.s32.totalorder %s204, %s207
      %p213 = scmp.eq.s32.totalorder %s22, 0
      %p214 = por %p212, %p213
      %p215 = scmp.ne.s32.totalorder %s204, %s207
      %p216 = scmp.eq.s32.totalorder %s27, 3
      %p217 = por %p215, %p216
      %p218 = scmp.ne.s32.totalorder %s207, %s208
      %p219 = scmp.eq.s32.totalorder %s27, 0
      %p220 = por %p218, %p219
      %p221 = scmp.ne.s32.totalorder %s207, %s208
      %p222 = scmp.eq.s32.totalorder %s28, 3
      %p223 = por %p221, %p222
      %p225 = scmp.ne.s32.totalorder %s208, %s224
      %p226 = scmp.eq.s32.totalorder %s28, 0
      %p227 = por %p225, %p226
      %s228 = ssub.s32 %s29, %s41
      %s229 = ssub.s32 %s30, %s37
      %s230 = sor.u32 %s228, %s229
      %p231 = scmp.eq.s32.totalorder %s230, 0
      %s233 = sadd.s32 %s232, 1
      %s234 = scalar_select %p231, %s232, %s233
      %p237 = pneg %p231
      %p238 = scmp.eq.s32.totalorder %s22, 3
      %p239 = por %p237, %p238
      %p240 = scmp.ne.s32.totalorder %s232, %s235
      %p241 = scmp.eq.s32.totalorder %s22, 0
      %p242 = por %p240, %p241
      %p243 = scmp.ne.s32.totalorder %s232, %s235
      %p244 = scmp.eq.s32.totalorder %s27, 3
      %p245 = por %p243, %p244
      %p246 = scmp.ne.s32.totalorder %s235, %s236
      %p247 = scmp.eq.s32.totalorder %s27, 0
      %p248 = por %p246, %p247
      %p249 = scmp.ne.s32.totalorder %s235, %s236
      %p250 = scmp.eq.s32.totalorder %s28, 3
      %p251 = por %p249, %p250
      %p253 = scmp.ne.s32.totalorder %s236, %s252
      %p254 = scmp.eq.s32.totalorder %s28, 0
      %p255 = por %p253, %p254
      %s256 = ssub.s32 %s29, %s41
      %s257 = ssub.s32 %s30, %s37
      %s258 = sor.u32 %s256, %s257
      %p259 = scmp.eq.s32.totalorder %s258, 0
      %s261 = sadd.s32 %s260, 1
      %s262 = scalar_select %p259, %s260, %s261
      %p265 = pneg %p259
      %p266 = scmp.eq.s32.totalorder %s22, 3
      %p267 = por %p265, %p266
      %p268 = scmp.ne.s32.totalorder %s260, %s263
      %p269 = scmp.eq.s32.totalorder %s22, 0
      %p270 = por %p268, %p269
      %p271 = scmp.ne.s32.totalorder %s260, %s263
      %p272 = scmp.eq.s32.totalorder %s27, 3
      %p273 = por %p271, %p272
      %p274 = scmp.ne.s32.totalorder %s263, %s264
      %p275 = scmp.eq.s32.totalorder %s27, 0
      %p276 = por %p274, %p275
      %p277 = scmp.ne.s32.totalorder %s263, %s264
      %p278 = scmp.eq.s32.totalorder %s28, 3
      %p279 = por %p277, %p278
      %p281 = scmp.ne.s32.totalorder %s264, %s280
      %p282 = scmp.eq.s32.totalorder %s28, 0
      %p283 = por %p281, %p282
      %s284 = ssub.s32 %s29, %s41
      %s285 = ssub.s32 %s30, %s37
      %s286 = sor.u32 %s284, %s285
      %p287 = scmp.eq.s32.totalorder %s286, 0
      %s289 = sadd.s32 %s288, 1
      %s290 = scalar_select %p287, %s288, %s289
      %p293 = pneg %p287
      %p294 = scmp.eq.s32.totalorder %s22, 3
      %p295 = por %p293, %p294
      %p296 = scmp.ne.s32.totalorder %s288, %s291
      %p297 = scmp.eq.s32.totalorder %s22, 0
      %p298 = por %p296, %p297
      %p299 = scmp.ne.s32.totalorder %s288, %s291
      %p300 = scmp.eq.s32.totalorder %s27, 3
      %p301 = por %p299, %p300
      %p302 = scmp.ne.s32.totalorder %s291, %s292
      %p303 = scmp.eq.s32.totalorder %s27, 0
      %p304 = por %p302, %p303
      %p305 = scmp.ne.s32.totalorder %s291, %s292
      %p306 = scmp.eq.s32.totalorder %s28, 3
      %p307 = por %p305, %p306
      %p309 = scmp.ne.s32.totalorder %s292, %s308
      %p310 = scmp.eq.s32.totalorder %s28, 0
      %p311 = por %p309, %p310
      %p312 = scmp.le.s32.totalorder 1, %s22
      %p313 = scmp.lt.s32.totalorder %s22, 5
      %p314 = pnand %p312, %p313
      %p315 = pneg %p314
      // Predicated region
      $region9: #{tpu_custom_call.1} parent=5 // pred_check
        _
      $region10: #{tpu_custom_call.1} parent=5 // pred_check_branch
        %317 = sbr.rel (%p314) target = $region12
      $region11: #{tpu_custom_call.1} parent=5 // pred_region
        %s318 = ssub.s32 %s22, 1
      $region12: #{tpu_custom_call.1} parent=5 // pred_fallthru
        _
      %p319 = scmp.lt.s32.totalorder %s22, 4
      // Predicated region
      $region13: #{tpu_custom_call.1} parent=5 // pred_check
        %p320 = pneg %p319
      $region14: #{tpu_custom_call.1} parent=5 // pred_check_branch
        %322 = sbr.rel (%p320) target = $region16
      $region15: #{tpu_custom_call.1} parent=5 // pred_region
        // Predicated region
        $region17: #{tpu_custom_call.1} parent=15 // pred_check
          %p323 = pneg %p56
        $region18: #{tpu_custom_call.1} parent=15 // pred_check_branch
          %325 = sbr.rel (%p323) target = $region20
        $region19: #{tpu_custom_call.1} parent=15 // pred_region
          %p326 = scmp.lt.s32.totalorder %s29, 1
          %s327 = scalar_select %p326, %s29, 1
          %p328 = scmp.lt.s32.totalorder %s30, 1
          %s329 = scalar_select %p328, %s30, 1
          %s330 = smul.addr %s327, 2
          %s331 = sadd.s32 %s329, %s330
          %s332 = smul.addr %s331, 8
          %s333 = scalar_lea.vmem %s0, %s332
        $region20: #{tpu_custom_call.1} parent=15 // pred_fallthru
          _
        // Predicated region
        $region21: #{tpu_custom_call.1} parent=15 // pred_check
          %p334 = pneg %p82
        $region22: #{tpu_custom_call.1} parent=15 // pred_check_branch
          %336 = sbr.rel (%p334) target = $region24
        $region23: #{tpu_custom_call.1} parent=15 // pred_region
          %p337 = scmp.lt.s32.totalorder %s29, 1
          %s338 = scalar_select %p337, %s29, 1
          %s339 = smul.addr %s338, 8
          %s340 = smul.addr %s339, 8
          %s341 = scalar_lea.vmem %s1, %s340
        $region24: #{tpu_custom_call.1} parent=15 // pred_fallthru
          _
        // Predicated region
        $region25: #{tpu_custom_call.1} parent=15 // pred_check
          %p342 = pneg %p108
        $region26: #{tpu_custom_call.1} parent=15 // pred_check_branch
          %344 = sbr.rel (%p342) target = $region28
        $region27: #{tpu_custom_call.1} parent=15 // pred_region
          %p345 = scmp.lt.s32.totalorder %s29, 1
          %s346 = scalar_select %p345, %s29, 1
          %s347 = smul.addr %s346, 16
          %s348 = smul.addr %s347, 8
          %s349 = scalar_lea.vmem %s2, %s348
        $region28: #{tpu_custom_call.1} parent=15 // pred_fallthru
          _
        // Predicated region
        $region29: #{tpu_custom_call.1} parent=15 // pred_check
          %p350 = pneg %p134
        $region30: #{tpu_custom_call.1} parent=15 // pred_check_branch
          %352 = sbr.rel (%p350) target = $region32
        $region31: #{tpu_custom_call.1} parent=15 // pred_region
          %p353 = scmp.lt.s32.totalorder %s29, 1
          %s354 = scalar_select %p353, %s29, 1
          %s355 = scalar_lea.vmem %s3, %s354
        $region32: #{tpu_custom_call.1} parent=15 // pred_fallthru
          _
        // Predicated region
        $region33: #{tpu_custom_call.1} parent=15 // pred_check
          %p356 = pneg %p160
        $region34: #{tpu_custom_call.1} parent=15 // pred_check_branch
          %358 = sbr.rel (%p356) target = $region36
        $region35: #{tpu_custom_call.1} parent=15 // pred_region
          %p359 = scmp.lt.s32.totalorder %s29, 1
          %s360 = scalar_select %p359, %s29, 1
          %s361 = scalar_lea.vmem %s4, %s360
        $region36: #{tpu_custom_call.1} parent=15 // pred_fallthru
          _
        // Predicated region
        $region37: #{tpu_custom_call.1} parent=15 // pred_check
          %p362 = pneg %p186
        $region38: #{tpu_custom_call.1} parent=15 // pred_check_branch
          %364 = sbr.rel (%p362) target = $region40
        $region39: #{tpu_custom_call.1} parent=15 // pred_region
          %p365 = scmp.lt.s32.totalorder %s29, 1
          %s366 = scalar_select %p365, %s29, 1
          %s367 = scalar_lea.vmem %s5, %s366
        $region40: #{tpu_custom_call.1} parent=15 // pred_fallthru
          _
      $region16: #{tpu_custom_call.1} parent=5 // pred_fallthru
        _
      %p368 = scmp.le.s32.totalorder 1, %s22
      %p369 = scmp.lt.s32.totalorder %s22, 5
      %p370 = pnand %p368, %p369
      %p371 = pneg %p370
      // Predicated region
      $region41: #{tpu_custom_call.1} parent=5 // pred_check
        _
      $region42: #{tpu_custom_call.1} parent=5 // pred_check_branch
        %373 = sbr.rel (%p370) target = $region44
      $region43: #{tpu_custom_call.1} parent=5 // pred_region
        %s374 = ssub.s32 %s22, 1
        %p375 = scmp.lt.s32.totalorder %s31, 1
        %s376 = scalar_select %p375, %s31, 1
        %p377 = scmp.lt.s32.totalorder %s32, 1
        %s378 = scalar_select %p377, %s32, 1
        %s379 = smul.addr %s376, 2
        %s380 = sadd.s32 %s378, %s379
        %s381 = smul.addr %s380, 8
        %s382 = scalar_lea.vmem %s0, %s381
        %p383 = pneg %p62
        %p384 = pneg %p59
        %p385 = scmp.lt.s32.totalorder %s31, 1
        %s386 = scalar_select %p385, %s31, 1
        %s387 = smul.addr %s386, 8
        %s388 = smul.addr %s387, 8
        %s389 = scalar_lea.vmem %s1, %s388
        %p390 = pneg %p88
        %p391 = pneg %p85
        %p392 = scmp.lt.s32.totalorder %s31, 1
        %s393 = scalar_select %p392, %s31, 1
        %s394 = smul.addr %s393, 16
        %s395 = smul.addr %s394, 8
        %s396 = scalar_lea.vmem %s2, %s395
        %p397 = pneg %p114
        %p398 = pneg %p111
        %p399 = scmp.lt.s32.totalorder %s31, 1
        %s400 = scalar_select %p399, %s31, 1
        %s401 = scalar_lea.vmem %s3, %s400
        %p402 = pneg %p140
        %p403 = pneg %p137
        %p404 = scmp.lt.s32.totalorder %s31, 1
        %s405 = scalar_select %p404, %s31, 1
        %s406 = scalar_lea.vmem %s4, %s405
        %p407 = pneg %p166
        %p408 = pneg %p163
        %p409 = scmp.lt.s32.totalorder %s31, 1
        %s410 = scalar_select %p409, %s31, 1
        %s411 = scalar_lea.vmem %s5, %s410
        %p412 = pneg %p192
        %p413 = pneg %p189
        %p414 = pneg %p220
        %p415 = pneg %p217
        %s416 = sand.u32 %s207, 1
        %s417 = scalar_lea.sflag [#allocation3], %s416
        %s418 = sand.u32 %s207, 1
        %s419 = smul.addr %s418, 8
        %s420 = scalar_lea.vmem [#allocation2], %s419
        %p421 = pneg %p248
        %p422 = pneg %p245
        %s423 = sand.u32 %s235, 1
        %s424 = scalar_lea.sflag [#allocation5], %s423
        %s425 = sand.u32 %s235, 1
        %s426 = smul.addr %s425, 8
        %s427 = scalar_lea.vmem [#allocation4], %s426
        %p428 = pneg %p276
        %p429 = pneg %p273
        %p430 = scmp.lt.s32.totalorder %s31, 1
        %s431 = scalar_select %p430, %s31, 1
        %p432 = scmp.lt.s32.totalorder %s32, 1
        %s433 = scalar_select %p432, %s32, 1
        %s434 = smul.addr %s431, 2
        %s435 = sadd.s32 %s433, %s434
        %s436 = smul.addr %s435, 8
        %s437 = scalar_lea.vmem %s8, %s436
        %p438 = pneg %p304
        %p439 = pneg %p301
        %p440 = scmp.lt.s32.totalorder %s31, 1
        %s441 = scalar_select %p440, %s31, 1
        %p442 = scmp.lt.s32.totalorder %s32, 1
        %s443 = scalar_select %p442, %s32, 1
        %s444 = smul.addr %s441, 2
        %s445 = sadd.s32 %s443, %s444
        %s446 = smul.addr %s445, 8
        %s447 = scalar_lea.vmem %s9, %s446
        %p448 = scmp.lt.s32.totalorder %s31, 1
        %s449 = scalar_select %p448, %s31, 1
        %p450 = scmp.lt.s32.totalorder %s32, 1
        %s451 = scalar_select %p450, %s32, 1
        %s452 = smul.addr %s449, 2
        %s453 = sadd.s32 %s451, %s452
        %s454 = smul.addr %s453, 8
        %s455 = scalar_lea.vmem %s0, %s454
        %p456 = scmp.lt.s32.totalorder %s31, 1
        %s457 = scalar_select %p456, %s31, 1
        %s458 = smul.addr %s457, 8
        %s459 = smul.addr %s458, 8
        %s460 = scalar_lea.vmem %s1, %s459
        %p461 = scmp.lt.s32.totalorder %s31, 1
        %s462 = scalar_select %p461, %s31, 1
        %s463 = smul.addr %s462, 16
        %s464 = smul.addr %s463, 8
        %s465 = scalar_lea.vmem %s2, %s464
        %p466 = scmp.lt.s32.totalorder %s31, 1
        %s467 = scalar_select %p466, %s31, 1
        %s468 = scalar_lea.vmem %s3, %s467
        %p469 = scmp.lt.s32.totalorder %s31, 1
        %s470 = scalar_select %p469, %s31, 1
        %s471 = scalar_lea.vmem %s4, %s470
        %p472 = scmp.lt.s32.totalorder %s31, 1
        %s473 = scalar_select %p472, %s31, 1
        %s474 = scalar_lea.vmem %s5, %s473
        %p475 = scmp.lt.s32.totalorder %s31, 1
        %s476 = scalar_select %p475, %s31, 1
        %p477 = scmp.lt.s32.totalorder %s32, 1
        %s478 = scalar_select %p477, %s32, 1
        %s479 = smul.addr %s476, 2
        %s480 = sadd.s32 %s478, %s479
        %s481 = smul.addr %s480, 8
        %s482 = scalar_lea.vmem %s8, %s481
        %p483 = scmp.lt.s32.totalorder %s31, 1
        %s484 = scalar_select %p483, %s31, 1
        %p485 = scmp.lt.s32.totalorder %s32, 1
        %s486 = scalar_select %p485, %s32, 1
        %s487 = smul.addr %s484, 2
        %s488 = sadd.s32 %s486, %s487
        %s489 = smul.addr %s488, 8
        %s490 = scalar_lea.vmem %s9, %s489
        %v491 = vld [vmem:[%s455] sm:$0xff]
        %v492 = vld [vmem:[%s460] sm:$0xff]
        %v493 = vld [vmem:[%s460 + $0x8] sm:$0xff]
        %v494 = vld [vmem:[%s460 + $0x10] sm:$0xff]
        %v495 = vld [vmem:[%s460 + $0x18] sm:$0xff]
        %v496 = vld [vmem:[%s460 + $0x20] sm:$0xff]
        %v497 = vld [vmem:[%s460 + $0x28] sm:$0xff]
        %v498 = vld [vmem:[%s460 + $0x30] sm:$0xff]
        %v499 = vld [vmem:[%s460 + $0x38] sm:$0xff]
        %v500 = vld [vmem:[%s465] sm:$0xff]
        %v501 = vld [vmem:[%s465 + $0x8] sm:$0xff]
        %v502 = vld [vmem:[%s465 + $0x10] sm:$0xff]
        %v503 = vld [vmem:[%s465 + $0x18] sm:$0xff]
        %v504 = vld [vmem:[%s465 + $0x20] sm:$0xff]
        %v505 = vld [vmem:[%s465 + $0x28] sm:$0xff]
        %v506 = vld [vmem:[%s465 + $0x30] sm:$0xff]
        %v507 = vld [vmem:[%s465 + $0x38] sm:$0xff]
        %v508 = vld [vmem:[%s465 + $0x40] sm:$0xff]
        %v509 = vld [vmem:[%s465 + $0x48] sm:$0xff]
        %v510 = vld [vmem:[%s465 + $0x50] sm:$0xff]
        %v511 = vld [vmem:[%s465 + $0x58] sm:$0xff]
        %v512 = vld [vmem:[%s465 + $0x60] sm:$0xff]
        %v513 = vld [vmem:[%s465 + $0x68] sm:$0xff]
        %v514 = vld [vmem:[%s465 + $0x70] sm:$0xff]
        %v515 = vld [vmem:[%s465 + $0x78] sm:$0xff]
        %v516 = vld [vmem:[%s468] sm:$0x1]
        %v517 = vld [vmem:[%s471] sm:$0x1]
        %v518 = vld [vmem:[%s474] sm:$0x1]
        %v520 = vlaneseq
        %v521 = vshrl.u32 %v520, 7
        %v522 = vsub.s32 0, %v521
        %v523 = vrot.slane %v517, %v522
        %v525 = vsub.f32 %v491, %v523
        %v527 = vlaneseq
        %v528 = vshrl.u32 %v527, 7
        %v529 = vsub.s32 0, %v528
        %v530 = vrot.slane %v516, %v529
        %vm532 = vcmask 523264
        %v534 = vsel %vm532, %v525, 0
        %536 = vmatprep.subr.mxu0 0.0
        %537 = vmatpush1.msra.mxu0 %v492
        %538 = vmatprep.subr.mxu0 0.0
        %539 = vmatpush1.msra.mxu0 %v493
        %540 = vmatprep.subr.mxu0 0.0
        %541 = vmatpush1.msra.mxu0 %v494
        %542 = vmatprep.subr.mxu0 0.0
        %543 = vmatpush1.msra.mxu0 %v495
        %544 = vmatprep.subr.mxu0 0.0
        %545 = vmatpush1.msra.mxu0 %v496
        %546 = vmatprep.subr.mxu0 0.0
        %547 = vmatpush1.msra.mxu0 %v497
        %548 = vmatprep.subr.mxu0 0.0
        %549 = vmatpush1.msra.mxu0 %v498
        %550 = vmatprep.subr.mxu0 0.0
        %551 = vmatpush1.msra.mxu0 %v499
        %552 = vmatprep.subr.mxu0 0.0
        %553 = vmatpush1.msra.mxu0 0.0
        %554 = vmatprep.subr.mxu0 0.0
        %555 = vmatpush1.msra.mxu0 0.0
        %556 = vmatprep.subr.mxu0 0.0
        %557 = vmatpush1.msra.mxu0 0.0
        %558 = vmatprep.subr.mxu0 0.0
        %559 = vmatpush1.msra.mxu0 0.0
        %560 = vmatprep.subr.mxu0 0.0
        %561 = vmatpush1.msra.mxu0 0.0
        %562 = vmatprep.subr.mxu0 0.0
        %563 = vmatpush1.msra.mxu0 0.0
        %564 = vmatprep.subr.mxu0 0.0
        %565 = vmatpush1.msra.mxu0 0.0
        %566 = vmatprep.subr.mxu0 0.0
        %567 = vmatpush1.msra.mxu0 0.0
        %568 = vmatprep.subr.mxu0 0.0
        %569 = vmatpush1.msra.mxu0 0.0
        %570 = vmatprep.subr.mxu0 0.0
        %571 = vmatpush1.msra.mxu0 0.0
        %572 = vmatprep.subr.mxu0 0.0
        %573 = vmatpush1.msra.mxu0 0.0
        %574 = vmatprep.subr.mxu0 0.0
        %575 = vmatpush1.msra.mxu0 0.0
        %576 = vmatprep.subr.mxu0 0.0
        %577 = vmatpush1.msra.mxu0 0.0
        %578 = vmatprep.subr.mxu0 0.0
        %579 = vmatpush1.msra.mxu0 0.0
        %580 = vmatprep.subr.mxu0 0.0
        %581 = vmatpush1.msra.mxu0 0.0
        %582 = vmatprep.subr.mxu0 0.0
        %583 = vmatpush1.msra.mxu0 0.0
        %584 = vmatprep.subr.mxu0 0.0
        %585 = vmatpush1.msra.mxu0 0.0
        %586 = vmatprep.subr.mxu0 0.0
        %587 = vmatpush1.msra.mxu0 0.0
        %588 = vmatprep.subr.mxu0 0.0
        %589 = vmatpush1.msra.mxu0 0.0
        %590 = vmatprep.subr.mxu0 0.0
        %591 = vmatpush1.msra.mxu0 0.0
        %592 = vmatprep.subr.mxu0 0.0
        %593 = vmatpush1.msra.mxu0 0.0
        %594 = vmatprep.subr.mxu0 0.0
        %595 = vmatpush1.msra.mxu0 0.0
        %596 = vmatprep.subr.mxu0 0.0
        %597 = vmatpush1.msra.mxu0 0.0
        %598 = vmatprep.subr.mxu0 0.0
        %599 = vmatpush1.msra.mxu0 0.0
        %600 = vmatprep.mubr.f32.mxu0 0.0
        %601 = vmatmul.mubr.f32.gmra.mrb[0].mxu0 %v534
        %v602 = vpop.f32.mrb[0].mxu0
        %v603 = vadd.f32 %v530, %v602
        %v604 = vpop.f32.mrb[0].mxu0
        %605 = vdwg.mxu0
        %v606 = vmax.f32 %v603, 0.0
        %607 = vst [vmem:[%s420] sm:$0xff] %v606
        %v609 = vlaneseq
        %v610 = vshrl.u32 %v609, 7
        %v611 = vsub.s32 0, %v610
        %v612 = vrot.slane %v518, %v611
        %v614 = vmul.f32 %v606, %v612
        %615 = vmatprep.subr.mxu0 0.0
        %616 = vmatpush1.msra.mxu0 %v500
        %617 = vmatprep.subr.mxu0 0.0
        %618 = vmatpush1.msra.mxu0 %v501
        %619 = vmatprep.subr.mxu0 0.0
        %620 = vmatpush1.msra.mxu0 %v502
        %621 = vmatprep.subr.mxu0 0.0
        %622 = vmatpush1.msra.mxu0 %v503
        %623 = vmatprep.subr.mxu0 0.0
        %624 = vmatpush1.msra.mxu0 %v504
        %625 = vmatprep.subr.mxu0 0.0
        %626 = vmatpush1.msra.mxu0 %v505
        %627 = vmatprep.subr.mxu0 0.0
        %628 = vmatpush1.msra.mxu0 %v506
        %629 = vmatprep.subr.mxu0 0.0
        %630 = vmatpush1.msra.mxu0 %v507
        %631 = vmatprep.subr.mxu0 0.0
        %632 = vmatpush1.msra.mxu0 %v508
        %633 = vmatprep.subr.mxu0 0.0
        %634 = vmatpush1.msra.mxu0 %v509
        %635 = vmatprep.subr.mxu0 0.0
        %636 = vmatpush1.msra.mxu0 %v510
        %637 = vmatprep.subr.mxu0 0.0
        %638 = vmatpush1.msra.mxu0 %v511
        %639 = vmatprep.subr.mxu0 0.0
        %640 = vmatpush1.msra.mxu0 %v512
        %641 = vmatprep.subr.mxu0 0.0
        %642 = vmatpush1.msra.mxu0 %v513
        %643 = vmatprep.subr.mxu0 0.0
        %644 = vmatpush1.msra.mxu0 %v514
        %645 = vmatprep.subr.mxu0 0.0
        %646 = vmatpush1.msra.mxu0 %v515
        %647 = vmatprep.subr.mxu0 0.0
        %648 = vmatpush1.msra.mxu0 0.0
        %649 = vmatprep.subr.mxu0 0.0
        %650 = vmatpush1.msra.mxu0 0.0
        %651 = vmatprep.subr.mxu0 0.0
        %652 = vmatpush1.msra.mxu0 0.0
        %653 = vmatprep.subr.mxu0 0.0
        %654 = vmatpush1.msra.mxu0 0.0
        %655 = vmatprep.subr.mxu0 0.0
        %656 = vmatpush1.msra.mxu0 0.0
        %657 = vmatprep.subr.mxu0 0.0
        %658 = vmatpush1.msra.mxu0 0.0
        %659 = vmatprep.subr.mxu0 0.0
        %660 = vmatpush1.msra.mxu0 0.0
        %661 = vmatprep.subr.mxu0 0.0
        %662 = vmatpush1.msra.mxu0 0.0
        %663 = vmatprep.subr.mxu0 0.0
        %664 = vmatpush1.msra.mxu0 0.0
        %665 = vmatprep.subr.mxu0 0.0
        %666 = vmatpush1.msra.mxu0 0.0
        %667 = vmatprep.subr.mxu0 0.0
        %668 = vmatpush1.msra.mxu0 0.0
        %669 = vmatprep.subr.mxu0 0.0
        %670 = vmatpush1.msra.mxu0 0.0
        %671 = vmatprep.subr.mxu0 0.0
        %672 = vmatpush1.msra.mxu0 0.0
        %673 = vmatprep.subr.mxu0 0.0
        %674 = vmatpush1.msra.mxu0 0.0
        %675 = vmatprep.subr.mxu0 0.0
        %676 = vmatpush1.msra.mxu0 0.0
        %677 = vmatprep.subr.mxu0 0.0
        %678 = vmatpush1.msra.mxu0 0.0
        %679 = vmatprep.mubr.f32.mxu0 0.0
        %680 = vmatmul.mubr.f32.gmra.mrb[0].mxu0 %v614
        %v681 = vpop.f32.mrb[0].mxu0
        %v682 = vadd.f32 %v523, %v681
        %v683 = vpop.f32.mrb[0].mxu0
        %684 = vdwg.mxu0
        %685 = vst.msk [vmem:[%s427] sm:$0xff] %vm532, %v682
        %v686 = vsub.f32 %v682, %v491
        %v687 = vmul.f32 %v686, %v686
        %v688 = vsel %vm532, %v687, 0.0
        %689 = vadd.xlane.f32.xlu0 %v688
        %v690 = vpop.xlane.xlu0 %689
        %v691 = vrcp.pop 64.0
        %v692 = vmul.f32 %v690, %v691
        %vm693 = vcmask 7168
        %694 = vst.msk [vmem:[%s490] sm:$0xff] %vm693, %v692
        %v695 = vand.u32 2147483647, %v606
        %696 = vadd.xlane.f32.xlu0 %v695
        %v697 = vpop.xlane.xlu0 %696
        %698 = vst.msk [vmem:[%s482] sm:$0xff] %vm693, %v697
        %s699 = sand.u32 %s207, 1
        %s700 = scalar_lea.sflag [#allocation3], %s699
        %s701 = sand.u32 %s207, 1
        %s702 = smul.addr %s701, 8
        %s703 = scalar_lea.vmem [#allocation2], %s702
        %s704 = sand.u32 %s235, 1
        %s705 = scalar_lea.sflag [#allocation5], %s704
        %s706 = sand.u32 %s235, 1
        %s707 = smul.addr %s706, 8
        %s708 = scalar_lea.vmem [#allocation4], %s707
        %p709 = scmp.lt.s32.totalorder %s31, 1
        %s710 = scalar_select %p709, %s31, 1
        %p711 = scmp.lt.s32.totalorder %s32, 1
        %s712 = scalar_select %p711, %s32, 1
        %s713 = smul.addr %s710, 2
        %s714 = sadd.s32 %s712, %s713
        %s715 = smul.addr %s714, 8
        %s716 = scalar_lea.vmem %s8, %s715
        %p717 = scmp.lt.s32.totalorder %s31, 1
        %s718 = scalar_select %p717, %s31, 1
        %p719 = scmp.lt.s32.totalorder %s32, 1
        %s720 = scalar_select %p719, %s32, 1
        %s721 = smul.addr %s718, 2
        %s722 = sadd.s32 %s720, %s721
        %s723 = smul.addr %s722, 8
        %s724 = scalar_lea.vmem %s9, %s723
        // Predicated region
        $region45: #{tpu_custom_call.1} parent=43 // pred_check
          %p725 = pneg %p217
        $region46: #{tpu_custom_call.1} parent=43 // pred_check_branch
          %727 = sbr.rel (%p725) target = $region48
        $region47: #{tpu_custom_call.1} parent=43 // pred_region
          %s729 = ssub.s32 128, 128
          %730 = vsyncadd %s700, %s729
          %s731 = smul.addr %s31, 2
          %s732 = sadd.s32 %s32, %s731
          %s733 = smul.addr %s732, 128
          %s734 = scalar_lea.hbm %s6, %s733
          %s736 = sshll.u32 %s703, 4
          %s737 = int_to_ptr.vmem [resolvable:$true] %s736
          %739 = dma.vmem_to_hbm [thread:$0]  %s737, 128, %s734, %s700
        $region48: #{tpu_custom_call.1} parent=43 // pred_fallthru
          _
        // Predicated region
        $region49: #{tpu_custom_call.1} parent=43 // pred_check
          %p740 = pneg %p245
        $region50: #{tpu_custom_call.1} parent=43 // pred_check_branch
          %742 = sbr.rel (%p740) target = $region52
        $region51: #{tpu_custom_call.1} parent=43 // pred_region
          %s744 = ssub.s32 128, 128
          %745 = vsyncadd %s705, %s744
          %s746 = smul.addr %s31, 2
          %s747 = sadd.s32 %s32, %s746
          %s748 = smul.addr %s747, 128
          %s749 = scalar_lea.hbm %s7, %s748
          %s751 = sshll.u32 %s708, 4
          %s752 = int_to_ptr.vmem [resolvable:$true] %s751
          %754 = dma.vmem_to_hbm [thread:$0]  %s752, 128, %s749, %s705
        $region52: #{tpu_custom_call.1} parent=43 // pred_fallthru
          _
        // Predicated region
        $region53: #{tpu_custom_call.1} parent=43 // pred_check
          %p755 = pneg %p273
        $region54: #{tpu_custom_call.1} parent=43 // pred_check_branch
          %757 = sbr.rel (%p755) target = $region56
        $region55: #{tpu_custom_call.1} parent=43 // pred_region
          _
        $region56: #{tpu_custom_call.1} parent=43 // pred_fallthru
          _
        // Predicated region
        $region57: #{tpu_custom_call.1} parent=43 // pred_check
          %p758 = pneg %p301
        $region58: #{tpu_custom_call.1} parent=43 // pred_check_branch
          %760 = sbr.rel (%p758) target = $region60
        $region59: #{tpu_custom_call.1} parent=43 // pred_region
          _
        $region60: #{tpu_custom_call.1} parent=43 // pred_fallthru
          _
      $region44: #{tpu_custom_call.1} parent=5 // pred_fallthru
        _
      %p761 = scmp.le.s32.totalorder 2, %s22
      // Predicated region
      $region61: #{tpu_custom_call.1} parent=5 // pred_check
        %p762 = pneg %p761
      $region62: #{tpu_custom_call.1} parent=5 // pred_check_branch
        %764 = sbr.rel (%p762) target = $region64
      $region63: #{tpu_custom_call.1} parent=5 // pred_region
        %s765 = ssub.s32 %s22, 2
        // Predicated region
        $region65: #{tpu_custom_call.1} parent=63 // pred_check
          %p766 = pneg %p223
        $region66: #{tpu_custom_call.1} parent=63 // pred_check_branch
          %768 = sbr.rel (%p766) target = $region68
        $region67: #{tpu_custom_call.1} parent=63 // pred_region
          %s769 = sand.u32 %s208, 1
          %s770 = scalar_lea.sflag [#allocation3], %s769
          %s771 = sand.u32 %s208, 1
          %s772 = smul.addr %s771, 8
          %s773 = scalar_lea.vmem [#allocation2], %s772
          %774 = dma.done %s770, 128
        $region68: #{tpu_custom_call.1} parent=63 // pred_fallthru
          _
        // Predicated region
        $region69: #{tpu_custom_call.1} parent=63 // pred_check
          %p775 = pneg %p251
        $region70: #{tpu_custom_call.1} parent=63 // pred_check_branch
          %777 = sbr.rel (%p775) target = $region72
        $region71: #{tpu_custom_call.1} parent=63 // pred_region
          %s778 = sand.u32 %s236, 1
          %s779 = scalar_lea.sflag [#allocation5], %s778
          %s780 = sand.u32 %s236, 1
          %s781 = smul.addr %s780, 8
          %s782 = scalar_lea.vmem [#allocation4], %s781
          %783 = dma.done %s779, 128
        $region72: #{tpu_custom_call.1} parent=63 // pred_fallthru
          _
        // Predicated region
        $region73: #{tpu_custom_call.1} parent=63 // pred_check
          %p784 = pneg %p279
        $region74: #{tpu_custom_call.1} parent=63 // pred_check_branch
          %786 = sbr.rel (%p784) target = $region76
        $region75: #{tpu_custom_call.1} parent=63 // pred_region
          %p787 = scmp.lt.s32.totalorder %s33, 1
          %s788 = scalar_select %p787, %s33, 1
          %p789 = scmp.lt.s32.totalorder %s34, 1
          %s790 = scalar_select %p789, %s34, 1
          %s791 = smul.addr %s788, 2
          %s792 = sadd.s32 %s790, %s791
          %s793 = smul.addr %s792, 8
          %s794 = scalar_lea.vmem %s8, %s793
        $region76: #{tpu_custom_call.1} parent=63 // pred_fallthru
          _
        // Predicated region
        $region77: #{tpu_custom_call.1} parent=63 // pred_check
          %p795 = pneg %p307
        $region78: #{tpu_custom_call.1} parent=63 // pred_check_branch
          %797 = sbr.rel (%p795) target = $region80
        $region79: #{tpu_custom_call.1} parent=63 // pred_region
          %p798 = scmp.lt.s32.totalorder %s33, 1
          %s799 = scalar_select %p798, %s33, 1
          %p800 = scmp.lt.s32.totalorder %s34, 1
          %s801 = scalar_select %p800, %s34, 1
          %s802 = smul.addr %s799, 2
          %s803 = sadd.s32 %s801, %s802
          %s804 = smul.addr %s803, 8
          %s805 = scalar_lea.vmem %s9, %s804
        $region80: #{tpu_custom_call.1} parent=63 // pred_fallthru
          _
      $region64: #{tpu_custom_call.1} parent=5 // pred_fallthru
        _
    $region6: #{tpu_custom_call.1} parent=1 // loop_footer
      %s26 = sadd.s32 1, %s22
    $region7: #{tpu_custom_call.1} parent=1 // loop_footer_branch
      %21 = sbr.rel target = $region3
    $region8: #{tpu_custom_call.1} parent=1 // loop_exit
      _
    %806 = vsyncpa [#allocation3], 1
    %s807 = scalar_lea.sflag [#allocation3], 1
    %808 = vsyncpa %s807, 1
    %809 = vsyncpa [#allocation5], 1
    %s810 = scalar_lea.sflag [#allocation5], 1
    %811 = vsyncpa %s810, 1

</llo_original>
